<compile_context>
chip_gen: v6e
topology: v6e:2x2x1
jax: 0.10.0
libtpu: 0.0.40
codegen_flags: <defaults>
</compile_context>

<pallas_src>
import functools

import jax
import jax.numpy as jnp
from jax import lax
from jax.experimental import pallas as pl
from jax.experimental.pallas import tpu as pltpu

LANE = 128
SUBLANE = 8
CHUNK_ROWS = 512          # rows per inner accumulation chunk (256 KiB f32)


def _round_up(x: int, m: int) -> int:
    return ((x + m - 1) // m) * m


def _mse_kernel(a_ref, b_ref, out_ref, acc_ref, *, rows, inv_total_n):
    """grid = (num_splits, steps); axis 1 is the sequential reduction axis.

    rows        : number of valid rows in the (rows, 128) logical slab
                  (rows beyond the block's valid range are masked to 0).
    inv_total_n : 1 / true element count (padding never enters the mean).
    """
    p = pl.program_id(0)
    i = pl.program_id(1)
    steps = pl.num_programs(1)

    tm = a_ref.shape[0]                      # block rows (static, multiple of 8)
    chunk = min(CHUNK_ROWS, tm)              # multiple of 8
    n_chunks = tm // chunk
    tail = tm - n_chunks * chunk             # multiple of 8, < chunk

    @pl.when(i == 0)
    def _init():
        acc_ref[...] = jnp.zeros_like(acc_ref)

    blk = p * steps + i                      # intended global block index
    row0 = blk * tm                          # first (intended) global row

    def accum(local_r0, nrows, masked):
        # Chunked accumulate: loads -> sub -> (mask) -> square -> fold-add.
        a = a_ref[pl.ds(local_r0, nrows), :].astype(jnp.float32)
        b = b_ref[pl.ds(local_r0, nrows), :].astype(jnp.float32)
        d = a - b
        if masked:
            # Mask BEFORE squaring so garbage from the padded boundary block
            # (undefined out-of-bounds reads) can never leak into the sum.
            r = lax.broadcasted_iota(jnp.int32, (nrows, LANE), 0)
            valid = (row0 + local_r0 + r) < rows
            d = jnp.where(valid, d, 0.0)
        sq = d * d
        # Fold the (nrows, 128) chunk into the (8, 128) accumulator with pure
        # VPU vreg adds; the single cross-lane reduce happens only at the end.
        acc_ref[...] += jnp.sum(sq.reshape(nrows // SUBLANE, SUBLANE, LANE), axis=0)

    def run(masked):
        # Statically unrolled chunk loop (static slice starts -> zero-cost ref
        # views); the serial dependence through acc_ref bounds live ranges so
        # no (tm, 128) temporary ever materializes in VMEM.
        for c in range(n_chunks):
            accum(c * chunk, chunk, masked)
        if tail:
            accum(n_chunks * chunk, tail, masked)

    is_full = (row0 + tm) <= rows            # fully-valid block?

    @pl.when(is_full)
    def _fast():                              # hot path: no masking at all
        run(False)

    @pl.when(jnp.logical_not(is_full))
    def _ragged():                            # boundary / fully-OOB block
        run(True)

    @pl.when(i == steps - 1)
    def _finish():
        # One XLU cross-lane reduce + scale per split, written to SMEM.
        out_ref[0, 0] = jnp.sum(acc_ref[...]) * jnp.float32(inv_total_n)


def mse_loss_pallas(j_pred: jax.Array, j: jax.Array, *,
                    block_rows: int | None = None,
                    num_splits: int | None = None) -> jax.Array:
    """Mean-squared-error over all elements (== torch.nn.MSELoss()(J_pred, J)).

    Works for any shape/dtype; bf16 inputs are streamed as bf16 from HBM and
    accumulated in f32 inside the kernel.  Returns an f32 scalar.
    """
    assert j_pred.shape == j.shape, "J_pred and J must have identical shapes"
    total_n = j_pred.size
    assert total_n > 0
    # Note: mixed dtypes are allowed (both are cast to f32 in-kernel).

    # --- chip-aware configuration --------------------------------------------
    kind = ""
    try:
        kind = jax.devices()[0].device_kind.lower()
    except Exception:
        pass
    is_v7x = ("v7" in kind) or ("7x" in kind)
    is_v5e = ("v5 lite" in kind) or ("v5e" in kind) or ("v5litepod" in kind)

    if num_splits is None:
        num_splits = 2 if is_v7x else 1       # 2 TCs only on v7x

    itemsize = max(jnp.dtype(j_pred.dtype).itemsize, jnp.dtype(j.dtype).itemsize)
    # ~4 MiB per input per block (2 MiB on v5e whose default scoped VMEM is 16 MiB).
    block_bytes = (2 << 20) if is_v5e else (4 << 20)
    target_rows = max(CHUNK_ROWS, block_bytes // (LANE * itemsize))

    # --- geometry: lane-dense (rows, 128) view, zero-copy whenever possible ---
    rows_128 = pl.cdiv(total_n, LANE)
    if block_rows is None:
        tm_req = target_rows
    else:
        tm_req = max(SUBLANE, _round_up(int(block_rows), SUBLANE))

    if rows_128 > tm_req:
        # Large input: multi-block grid.  No padding at all when N % 128 == 0
        # (the typical case); the ragged last block is masked in-kernel.
        tm = tm_req
        padded_n = rows_128 * LANE
    else:
        # Small input: one block that exactly equals the (padded) array.
        padded_n = _round_up(total_n, LANE * SUBLANE)
        tm = padded_n // LANE

    rows = padded_n // LANE
    pad = padded_n - total_n

    a_flat = j_pred.reshape(-1)               # free reshapes (row-major contiguous)
    b_flat = j.reshape(-1)
    if pad:
        # Only hit when N % 128 != 0 or the input is tiny (< one block), so the
        # copy is either unavoidable with BlockSpec addressing or negligible.
        # TODO(synk): a fully copy-free path for lane-misaligned N needs manual
        # 1-D DMA via memory_space=pl.ANY.
        a_flat = jnp.pad(a_flat, (0, pad))
        b_flat = jnp.pad(b_flat, (0, pad))
    a2d = a_flat.reshape(rows, LANE)
    b2d = b_flat.reshape(rows, LANE)

    total_blocks = pl.cdiv(rows, tm)
    num_splits = max(1, min(int(num_splits), total_blocks))
    steps0 = pl.cdiv(total_blocks, num_splits)

    if is_v7x and num_splits == 2 and hasattr(pltpu, "CORE_PARALLEL"):
        semantics = (pltpu.CORE_PARALLEL, pltpu.ARBITRARY)   # real cross-TC sharding
    else:
        semantics = ("arbitrary", "arbitrary")

    buffered = steps0 >= 3                    # 3-deep input pipelining if useful
    nbuf = 3 if buffered else 2
    block_in_bytes = tm * LANE * itemsize
    vmem_cap = (48 << 20) if is_v7x else (100 << 20)   # v7x: 64 MiB physical / TC
    vmem_limit = int(min(vmem_cap, max(32 << 20, 2 * nbuf * block_in_bytes + (16 << 20))))

    inv_n = 1.0 / float(total_n)
    kernel = functools.partial(_mse_kernel, rows=rows, inv_total_n=inv_n)
    in_bytes = a2d.size * a2d.dtype.itemsize + b2d.size * b2d.dtype.itemsize

    # --- pallas_call builder ---------------------------------------------------
    def _run(tm_, num_splits_, semantics_, buffered_, vmem_limit_):
        total_blocks_ = pl.cdiv(rows, tm_)
        ns = max(1, min(num_splits_, total_blocks_))
        steps_ = pl.cdiv(total_blocks_, ns)

        def idx(p_, i_):
            # Clamp so a split's trailing (fully out-of-range) step re-reads the
            # last valid block instead of DMA-ing past the array; its
            # contribution is masked to zero in-kernel.
            return (jnp.minimum(p_ * steps_ + i_, total_blocks_ - 1), 0)

        spec_kwargs = {}
        if buffered_:
            spec_kwargs["pipeline_mode"] = pl.Buffered(3)
        in_specs = [pl.BlockSpec((tm_, LANE), idx, **spec_kwargs),
                    pl.BlockSpec((tm_, LANE), idx, **spec_kwargs)]

        cp_kwargs = dict(dimension_semantics=semantics_)
        if vmem_limit_:
            cp_kwargs["vmem_limit_bytes"] = vmem_limit_

        return pl.pallas_call(
            kernel,
            out_shape=jax.ShapeDtypeStruct((ns, 1), jnp.float32),
            grid_spec=pltpu.PrefetchScalarGridSpec(
                num_scalar_prefetch=0,
                grid=(ns, steps_),
                in_specs=in_specs,
                out_specs=pl.BlockSpec((1, 1), lambda p_, i_: (p_, 0),
                                       memory_space=pltpu.SMEM),
                scratch_shapes=[pltpu.VMEM((SUBLANE, LANE), jnp.float32)],
            ),
            compiler_params=pltpu.CompilerParams(**cp_kwargs),
            cost_estimate=pl.CostEstimate(
                flops=3 * total_n,                     # sub + mul + add / element
                transcendentals=0,
                bytes_accessed=int(in_bytes + 4 * ns),
            ),
        )(a2d, b2d)

    try:
        partials = _run(tm, num_splits, semantics, buffered, vmem_limit)
    except Exception:
        # Conservative fallback (single split, modest tiles, default buffering)
        # so the loss is always computed even if a chip-specific option is
        # unavailable on this runtime.
        partials = _run(min(tm, 2048), 1, ("arbitrary", "arbitrary"), False, None)

    # Each partial is already scaled by 1/N; summing the splits gives the mean.
    return jnp.sum(partials)


if __name__ == "__main__":
    key = jax.random.PRNGKey(0)
    ks = jax.random.split(key, 10)

    def _ref(a, b):
        return jnp.mean((a.astype(jnp.float32) - b.astype(jnp.float32)) ** 2)

    # 1) Aligned NCHW-like shape (what the module sees for J / J_pred).
    B, C, H, W = 2, 4, 16, 16
    a = jax.random.normal(ks[0], (B, C, H, W), dtype=jnp.float32)
    b = jax.random.normal(ks[1], (B, C, H, W), dtype=jnp.float32)
    out = jax.block_until_ready(mse_loss_pallas(a, b))
    assert jnp.allclose(out, _ref(a, b), rtol=1e-5, atol=1e-6), (out, _ref(a, b))

    # 2) Misaligned element count (exercises the lane-padding fallback).
    a = jax.random.normal(ks[2], (3, 5, 7, 11), dtype=jnp.float32)
    b = jax.random.normal(ks[3], (3, 5, 7, 11), dtype=jnp.float32)
    out = jax.block_until_ready(mse_loss_pallas(a, b))
    assert jnp.allclose(out, _ref(a, b), rtol=1e-5, atol=1e-6), (out, _ref(a, b))

    # 3) bf16 inputs: streamed as bf16, accumulated in f32 in-kernel.
    a = jax.random.normal(ks[4], (B, C, H, W), dtype=jnp.bfloat16)
    b = jax.random.normal(ks[5], (B, C, H, W), dtype=jnp.bfloat16)
    out = jax.block_until_ready(mse_loss_pallas(a, b))
    assert jnp.allclose(out, _ref(a, b), rtol=1e-4, atol=1e-5), (out, _ref(a, b))

    # 4) Multi-block grid with a ragged (masked) last block, zero-copy path.
    a = jax.random.normal(ks[6], (2, 5, 16, 16), dtype=jnp.float32)   # 20 rows
    b = jax.random.normal(ks[7], (2, 5, 16, 16), dtype=jnp.float32)
    out = jax.block_until_ready(mse_loss_pallas(a, b, block_rows=8))
    assert jnp.allclose(out, _ref(a, b), rtol=1e-5, atol=1e-6), (out, _ref(a, b))

    # 5) Split axis (serial on 1-TC chips, CORE_PARALLEL on v7x), including an
    #    entirely out-of-range (clamped + fully-masked) trailing block.
    out = jax.block_until_ready(mse_loss_pallas(a, b, block_rows=8, num_splits=2))
    assert jnp.allclose(out, _ref(a, b), rtol=1e-5, atol=1e-6), (out, _ref(a, b))

    # 6) Multi-chunk inner accumulation (rows > CHUNK_ROWS).
    a = jax.random.normal(ks[8], (2, 4, 128, 128), dtype=jnp.float32)  # 1024 rows
    b = jax.random.normal(ks[9], (2, 4, 128, 128), dtype=jnp.float32)
    out = jax.block_until_ready(mse_loss_pallas(a, b))
    assert jnp.allclose(out, _ref(a, b), rtol=1e-5, atol=1e-6), (out, _ref(a, b))

    print("KERNEL_OK")
</pallas_src>

<mosaic_0001>
module attributes {stable_mosaic.version = 11 : i64} {
  func.func @_mse_kernel(%arg0: i32, %arg1: i32, %arg2: memref<16x128xf32, #tpu.memory_space<vmem>>, %arg3: memref<16x128xf32, #tpu.memory_space<vmem>>, %arg4: memref<1x1xf32, #tpu.memory_space<smem>>, %arg5: memref<8x128xf32, #tpu.memory_space<vmem>>) attributes {dimension_semantics = [#tpu.dimension_semantics<arbitrary>, #tpu.dimension_semantics<arbitrary>], iteration_bounds = array<i64: 1, 1>, scalar_prefetch = 0 : i64, scratch_operands = 1 : i64, tpu.core_type = #tpu.core_type<tc>, window_params = [{transform_indices = @transform_0, window_bounds = array<i64: 16, 128>}, {transform_indices = @transform_1, window_bounds = array<i64: 16, 128>}, {transform_indices = @transform_2, window_bounds = array<i64: 1, 1>}]} {
    %c0_i32 = arith.constant 0 : i32
    %0 = arith.cmpi eq, %arg1, %c0_i32 : i32
    %1 = arith.extui %0 : i1 to i32
    %c0_i32_0 = arith.constant 0 : i32
    %2 = arith.cmpi ne, %1, %c0_i32_0 : i32
    scf.if %2 {
      %cst = arith.constant 0.000000e+00 : f32
      %16 = vector.broadcast %cst : f32 to vector<8x128xf32>
      %c0 = arith.constant 0 : index
      %c0_7 = arith.constant 0 : index
      %17 = vector.load %arg5[%c0, %c0_7] : memref<8x128xf32, #tpu.memory_space<vmem>>, vector<8x128xf32>
      tpu.vector_store %arg5[%c0, %c0_7], %16 {strides = array<i32>} : memref<8x128xf32, #tpu.memory_space<vmem>>, vector<8x128xf32>,
    } else {
    }
    %c1_i32 = arith.constant 1 : i32
    %3 = arith.muli %arg0, %c1_i32 : i32
    %4 = arith.addi %3, %arg1 : i32
    %c16_i32 = arith.constant 16 : i32
    %5 = arith.muli %4, %c16_i32 : i32
    %c16_i32_1 = arith.constant 16 : i32
    %6 = arith.addi %5, %c16_i32_1 : i32
    %c16_i32_2 = arith.constant 16 : i32
    %7 = arith.cmpi sle, %6, %c16_i32_2 : i32
    %8 = arith.extui %7 : i1 to i32
    %c0_i32_3 = arith.constant 0 : i32
    %9 = arith.cmpi ne, %8, %c0_i32_3 : i32
    scf.if %9 {
      %c0 = arith.constant 0 : index
      %c0_7 = arith.constant 0 : index
      %16 = vector.load %arg2[%c0, %c0_7] : memref<16x128xf32, #tpu.memory_space<vmem>>, vector<16x128xf32>
      %c0_8 = arith.constant 0 : index
      %c0_9 = arith.constant 0 : index
      %17 = vector.load %arg3[%c0_8, %c0_9] : memref<16x128xf32, #tpu.memory_space<vmem>>, vector<16x128xf32>
      %18 = arith.subf %16, %17 : vector<16x128xf32>
      %19 = arith.mulf %18, %18 : vector<16x128xf32>
      %c0_10 = arith.constant 0 : index
      %c0_11 = arith.constant 0 : index
      %20 = vector.load %arg5[%c0_10, %c0_11] : memref<8x128xf32, #tpu.memory_space<vmem>>, vector<8x128xf32>
      %21 = vector.shape_cast %19 : vector<16x128xf32> to vector<2x8x128xf32>
      %cst = arith.constant dense<0.000000e+00> : vector<8x128xf32>
      %22 = vector.multi_reduction <add>, %21, %cst [0] : vector<2x8x128xf32> to vector<8x128xf32>
      %23 = arith.addf %20, %22 : vector<8x128xf32>
      %c0_12 = arith.constant 0 : index
      %c0_13 = arith.constant 0 : index
      %24 = vector.load %arg5[%c0_12, %c0_13] : memref<8x128xf32, #tpu.memory_space<vmem>>, vector<8x128xf32>
      tpu.vector_store %arg5[%c0_12, %c0_13], %23 {strides = array<i32>} : memref<8x128xf32, #tpu.memory_space<vmem>>, vector<8x128xf32>,
    } else {
    }
    %true = arith.constant true
    %10 = arith.xori %7, %true : i1
    %11 = arith.extui %10 : i1 to i32
    %c0_i32_4 = arith.constant 0 : i32
    %12 = arith.cmpi ne, %11, %c0_i32_4 : i32
    scf.if %12 {
      %c0 = arith.constant 0 : index
      %c0_7 = arith.constant 0 : index
      %16 = vector.load %arg2[%c0, %c0_7] : memref<16x128xf32, #tpu.memory_space<vmem>>, vector<16x128xf32>
      %c0_8 = arith.constant 0 : index
      %c0_9 = arith.constant 0 : index
      %17 = vector.load %arg3[%c0_8, %c0_9] : memref<16x128xf32, #tpu.memory_space<vmem>>, vector<16x128xf32>
      %18 = arith.subf %16, %17 : vector<16x128xf32>
      %19 = tpu.iota {dimensions = array<i32: 0>} : vector<16x128xi32>
      %c0_i32_10 = arith.constant 0 : i32
      %20 = arith.addi %5, %c0_i32_10 : i32
      %21 = vector.broadcast %20 : i32 to vector<16x128xi32>
      %22 = arith.addi %21, %19 : vector<16x128xi32>
      %c16_i32_11 = arith.constant 16 : i32
      %23 = vector.broadcast %c16_i32_11 : i32 to vector<16x128xi32>
      %24 = arith.cmpi slt, %22, %23 : vector<16x128xi32>
      %cst = arith.constant 0.000000e+00 : f32
      %25 = vector.broadcast %cst : f32 to vector<16x128xf32>
      %26 = arith.select %24, %18, %25 : vector<16x128xi1>, vector<16x128xf32>
      %27 = arith.mulf %26, %26 : vector<16x128xf32>
      %c0_12 = arith.constant 0 : index
      %c0_13 = arith.constant 0 : index
      %28 = vector.load %arg5[%c0_12, %c0_13] : memref<8x128xf32, #tpu.memory_space<vmem>>, vector<8x128xf32>
      %29 = vector.shape_cast %27 : vector<16x128xf32> to vector<2x8x128xf32>
      %cst_14 = arith.constant dense<0.000000e+00> : vector<8x128xf32>
      %30 = vector.multi_reduction <add>, %29, %cst_14 [0] : vector<2x8x128xf32> to vector<8x128xf32>
      %31 = arith.addf %28, %30 : vector<8x128xf32>
      %c0_15 = arith.constant 0 : index
      %c0_16 = arith.constant 0 : index
      %32 = vector.load %arg5[%c0_15, %c0_16] : memref<8x128xf32, #tpu.memory_space<vmem>>, vector<8x128xf32>
      tpu.vector_store %arg5[%c0_15, %c0_16], %31 {strides = array<i32>} : memref<8x128xf32, #tpu.memory_space<vmem>>, vector<8x128xf32>,
    } else {
    }
    %c0_i32_5 = arith.constant 0 : i32
    %13 = arith.cmpi eq, %arg1, %c0_i32_5 : i32
    %14 = arith.extui %13 : i1 to i32
    %c0_i32_6 = arith.constant 0 : i32
    %15 = arith.cmpi ne, %14, %c0_i32_6 : i32
    scf.if %15 {
      %c0 = arith.constant 0 : index
      %c0_7 = arith.constant 0 : index
      %16 = vector.load %arg5[%c0, %c0_7] : memref<8x128xf32, #tpu.memory_space<vmem>>, vector<8x128xf32>
      %17 = vector.shape_cast %16 : vector<8x128xf32> to vector<1x8x128xf32>
      %cst = arith.constant dense<0.000000e+00> : vector<1xf32>
      %18 = vector.multi_reduction <add>, %17, %cst [1, 2] : vector<1x8x128xf32> to vector<1xf32>
      %19 = vector.shape_cast %18 : vector<1xf32> to vector<1x1x1xf32>
      %20 = vector.extract %19[0, 0, 0] : f32 from vector<1x1x1xf32>
      %cst_8 = arith.constant 4.8828125E-4 : f32
      %21 = arith.mulf %20, %cst_8 : f32
      %c0_9 = arith.constant 0 : index
      %c0_10 = arith.constant 0 : index
      %22 = memref.load %arg4[%c0_9, %c0_10] : memref<1x1xf32, #tpu.memory_space<smem>>
      memref.store %21, %arg4[%c0_9, %c0_10] : memref<1x1xf32, #tpu.memory_space<smem>>
    } else {
    }
    return
  }
  func.func @transform_0(%arg0: i32, %arg1: i32) -> (i32, i32) {
    %c1_i32 = arith.constant 1 : i32
    %0 = arith.muli %arg0, %c1_i32 : i32
    %1 = arith.addi %0, %arg1 : i32
    %c0_i32 = arith.constant 0 : i32
    %2 = arith.minsi %1, %c0_i32 : i32
    %c0_i32_0 = arith.constant 0 : i32
    %c0_i32_1 = arith.constant 0 : i32
    return %2, %c0_i32_0 : i32, i32
  }
  func.func @transform_1(%arg0: i32, %arg1: i32) -> (i32, i32) {
    %c1_i32 = arith.constant 1 : i32
    %0 = arith.muli %arg0, %c1_i32 : i32
    %1 = arith.addi %0, %arg1 : i32
    %c0_i32 = arith.constant 0 : i32
    %2 = arith.minsi %1, %c0_i32 : i32
    %c0_i32_0 = arith.constant 0 : i32
    %c0_i32_1 = arith.constant 0 : i32
    return %2, %c0_i32_0 : i32, i32
  }
  func.func @transform_2(%arg0: i32, %arg1: i32) -> (i32, i32) {
    %c0_i32 = arith.constant 0 : i32
    %c0_i32_0 = arith.constant 0 : i32
    return %arg0, %c0_i32 : i32, i32
  }
}

module attributes {stable_mosaic.version = 11 : i64} {
  func.func @_mse_kernel(%arg0: i32, %arg1: i32, %arg2: memref<16x128xf32, #tpu.memory_space<vmem>>, %arg3: memref<16x128xf32, #tpu.memory_space<vmem>>, %arg4: memref<1x1xf32, #tpu.memory_space<smem>>, %arg5: memref<8x128xf32, #tpu.memory_space<vmem>>) attributes {dimension_semantics = [#tpu.dimension_semantics<arbitrary>, #tpu.dimension_semantics<arbitrary>], iteration_bounds = array<i64: 1, 1>, scalar_prefetch = 0 : i64, scratch_operands = 1 : i64, tpu.core_type = #tpu.core_type<tc>, window_params = [{transform_indices = @transform_0, window_bounds = array<i64: 16, 128>}, {transform_indices = @transform_1, window_bounds = array<i64: 16, 128>}, {transform_indices = @transform_2, window_bounds = array<i64: 1, 1>}]} {
    %c0_i32 = arith.constant 0 : i32
    %0 = arith.cmpi eq, %arg1, %c0_i32 : i32
    %1 = arith.extui %0 : i1 to i32
    %c0_i32_0 = arith.constant 0 : i32
    %2 = arith.cmpi ne, %1, %c0_i32_0 : i32
    scf.if %2 {
      %cst = arith.constant 0.000000e+00 : f32
      %16 = vector.broadcast %cst : f32 to vector<8x128xf32>
      %c0 = arith.constant 0 : index
      %c0_7 = arith.constant 0 : index
      %17 = vector.load %arg5[%c0, %c0_7] : memref<8x128xf32, #tpu.memory_space<vmem>>, vector<8x128xf32>
      tpu.vector_store %arg5[%c0, %c0_7], %16 {strides = array<i32>} : memref<8x128xf32, #tpu.memory_space<vmem>>, vector<8x128xf32>,
    } else {
    }
    %c1_i32 = arith.constant 1 : i32
    %3 = arith.muli %arg0, %c1_i32 : i32
    %4 = arith.addi %3, %arg1 : i32
    %c16_i32 = arith.constant 16 : i32
    %5 = arith.muli %4, %c16_i32 : i32
    %c16_i32_1 = arith.constant 16 : i32
    %6 = arith.addi %5, %c16_i32_1 : i32
    %c16_i32_2 = arith.constant 16 : i32
    %7 = arith.cmpi sle, %6, %c16_i32_2 : i32
    %8 = arith.extui %7 : i1 to i32
    %c0_i32_3 = arith.constant 0 : i32
    %9 = arith.cmpi ne, %8, %c0_i32_3 : i32
    scf.if %9 {
      %c0 = arith.constant 0 : index
      %c0_7 = arith.constant 0 : index
      %16 = vector.load %arg2[%c0, %c0_7] : memref<16x128xf32, #tpu.memory_space<vmem>>, vector<16x128xf32>
      %c0_8 = arith.constant 0 : index
      %c0_9 = arith.constant 0 : index
      %17 = vector.load %arg3[%c0_8, %c0_9] : memref<16x128xf32, #tpu.memory_space<vmem>>, vector<16x128xf32>
      %18 = arith.subf %16, %17 : vector<16x128xf32>
      %19 = arith.mulf %18, %18 : vector<16x128xf32>
      %c0_10 = arith.constant 0 : index
      %c0_11 = arith.constant 0 : index
      %20 = vector.load %arg5[%c0_10, %c0_11] : memref<8x128xf32, #tpu.memory_space<vmem>>, vector<8x128xf32>
      %21 = vector.shape_cast %19 : vector<16x128xf32> to vector<2x8x128xf32>
      %cst = arith.constant dense<0.000000e+00> : vector<8x128xf32>
      %22 = vector.multi_reduction <add>, %21, %cst [0] : vector<2x8x128xf32> to vector<8x128xf32>
      %23 = arith.addf %20, %22 : vector<8x128xf32>
      %c0_12 = arith.constant 0 : index
      %c0_13 = arith.constant 0 : index
      %24 = vector.load %arg5[%c0_12, %c0_13] : memref<8x128xf32, #tpu.memory_space<vmem>>, vector<8x128xf32>
      tpu.vector_store %arg5[%c0_12, %c0_13], %23 {strides = array<i32>} : memref<8x128xf32, #tpu.memory_space<vmem>>, vector<8x128xf32>,
    } else {
    }
    %true = arith.constant true
    %10 = arith.xori %7, %true : i1
    %11 = arith.extui %10 : i1 to i32
    %c0_i32_4 = arith.constant 0 : i32
    %12 = arith.cmpi ne, %11, %c0_i32_4 : i32
    scf.if %12 {
      %c0 = arith.constant 0 : index
      %c0_7 = arith.constant 0 : index
      %16 = vector.load %arg2[%c0, %c0_7] : memref<16x128xf32, #tpu.memory_space<vmem>>, vector<16x128xf32>
      %c0_8 = arith.constant 0 : index
      %c0_9 = arith.constant 0 : index
      %17 = vector.load %arg3[%c0_8, %c0_9] : memref<16x128xf32, #tpu.memory_space<vmem>>, vector<16x128xf32>
      %18 = arith.subf %16, %17 : vector<16x128xf32>
      %19 = tpu.iota {dimensions = array<i32: 0>} : vector<16x128xi32>
      %c0_i32_10 = arith.constant 0 : i32
      %20 = arith.addi %5, %c0_i32_10 : i32
      %21 = vector.broadcast %20 : i32 to vector<16x128xi32>
      %22 = arith.addi %21, %19 : vector<16x128xi32>
      %c16_i32_11 = arith.constant 16 : i32
      %23 = vector.broadcast %c16_i32_11 : i32 to vector<16x128xi32>
      %24 = arith.cmpi slt, %22, %23 : vector<16x128xi32>
      %cst = arith.constant 0.000000e+00 : f32
      %25 = vector.broadcast %cst : f32 to vector<16x128xf32>
      %26 = arith.select %24, %18, %25 : vector<16x128xi1>, vector<16x128xf32>
      %27 = arith.mulf %26, %26 : vector<16x128xf32>
      %c0_12 = arith.constant 0 : index
      %c0_13 = arith.constant 0 : index
      %28 = vector.load %arg5[%c0_12, %c0_13] : memref<8x128xf32, #tpu.memory_space<vmem>>, vector<8x128xf32>
      %29 = vector.shape_cast %27 : vector<16x128xf32> to vector<2x8x128xf32>
      %cst_14 = arith.constant dense<0.000000e+00> : vector<8x128xf32>
      %30 = vector.multi_reduction <add>, %29, %cst_14 [0] : vector<2x8x128xf32> to vector<8x128xf32>
      %31 = arith.addf %28, %30 : vector<8x128xf32>
      %c0_15 = arith.constant 0 : index
      %c0_16 = arith.constant 0 : index
      %32 = vector.load %arg5[%c0_15, %c0_16] : memref<8x128xf32, #tpu.memory_space<vmem>>, vector<8x128xf32>
      tpu.vector_store %arg5[%c0_15, %c0_16], %31 {strides = array<i32>} : memref<8x128xf32, #tpu.memory_space<vmem>>, vector<8x128xf32>,
    } else {
    }
    %c0_i32_5 = arith.constant 0 : i32
    %13 = arith.cmpi eq, %arg1, %c0_i32_5 : i32
    %14 = arith.extui %13 : i1 to i32
    %c0_i32_6 = arith.constant 0 : i32
    %15 = arith.cmpi ne, %14, %c0_i32_6 : i32
    scf.if %15 {
      %c0 = arith.constant 0 : index
      %c0_7 = arith.constant 0 : index
      %16 = vector.load %arg5[%c0, %c0_7] : memref<8x128xf32, #tpu.memory_space<vmem>>, vector<8x128xf32>
      %17 = vector.shape_cast %16 : vector<8x128xf32> to vector<1x8x128xf32>
      %cst = arith.constant dense<0.000000e+00> : vector<1xf32>
      %18 = vector.multi_reduction <add>, %17, %cst [1, 2] : vector<1x8x128xf32> to vector<1xf32>
      %19 = vector.shape_cast %18 : vector<1xf32> to vector<1x1x1xf32>
      %20 = vector.extract %19[0, 0, 0] : f32 from vector<1x1x1xf32>
      %cst_8 = arith.constant 4.8828125E-4 : f32
      %21 = arith.mulf %20, %cst_8 : f32
      %c0_9 = arith.constant 0 : index
      %c0_10 = arith.constant 0 : index
      %22 = memref.load %arg4[%c0_9, %c0_10] : memref<1x1xf32, #tpu.memory_space<smem>>
      memref.store %21, %arg4[%c0_9, %c0_10] : memref<1x1xf32, #tpu.memory_space<smem>>
    } else {
    }
    return
  }
  func.func @transform_0(%arg0: i32, %arg1: i32) -> (i32, i32) {
    %c1_i32 = arith.constant 1 : i32
    %0 = arith.muli %arg0, %c1_i32 : i32
    %1 = arith.addi %0, %arg1 : i32
    %c0_i32 = arith.constant 0 : i32
    %2 = arith.minsi %1, %c0_i32 : i32
    %c0_i32_0 = arith.constant 0 : i32
    %c0_i32_1 = arith.constant 0 : i32
    return %2, %c0_i32_0 : i32, i32
  }
  func.func @transform_1(%arg0: i32, %arg1: i32) -> (i32, i32) {
    %c1_i32 = arith.constant 1 : i32
    %0 = arith.muli %arg0, %c1_i32 : i32
    %1 = arith.addi %0, %arg1 : i32
    %c0_i32 = arith.constant 0 : i32
    %2 = arith.minsi %1, %c0_i32 : i32
    %c0_i32_0 = arith.constant 0 : i32
    %c0_i32_1 = arith.constant 0 : i32
    return %2, %c0_i32_0 : i32, i32
  }
  func.func @transform_2(%arg0: i32, %arg1: i32) -> (i32, i32) {
    %c0_i32 = arith.constant 0 : i32
    %c0_i32_0 = arith.constant 0 : i32
    return %arg0, %c0_i32 : i32, i32
  }
}

</mosaic_0001>

<llo_original>
// kernel: tpu_custom_call.1
$region0: #{tpu_custom_call.1}
  #allocation0 [shape = 'u32[]', space=smem, size = 0x4, offset = 0x4, fixed_abs, tag = 'smem constant byte address 0x4 - core index']
  #allocation1 [shape = 'u32[144,128]{1,0:T(1,128)}', space=vmem, size = 0x12000, scoped, tag = 'internal scratch']
  #allocation2 [shape = 'f32[8,128]{1,0:T(8,128)}', space=vmem, size = 0x1000, scoped, tag = 'scratch operand']
  %s0 = inlined_call_operand.hbm [shape: f32[16,128], index: 0, kind: input, shape index: {}]
  %s1 = inlined_call_operand.hbm [shape: f32[16,128], index: 1, kind: input, shape index: {}]
  %s2 = inlined_call_operand.hbm [shape: f32[1,1], index: 2, kind: output, shape index: {}]
  %s3 = sld [smem:[#allocation0]]
  $region42: #{tpu_custom_call.1} parent=0
    _
  %s5 = ssub.s32 1, %s3
  %s6 = scalar_select 0, %s5, %s3
  $region1: #{tpu_custom_call.1} parent=0
    #allocation3 [shape = 'u8[8192]{0}', space=vmem, size = 0x2000, scoped, tag = 'input window, operand 0, single buffered']
    #allocation4 [shape = 's32[1]{0}', space=sflag, size = 0x4, scoped, tag = 'scoped memory for tpu_custom_call.1']
    #allocation5 [shape = 's32[1]{0}', space=sflag, size = 0x4, scoped, tag = 'scoped memory for tpu_custom_call.1']
    #allocation6 [shape = 'u8[8192]{0}', space=vmem, size = 0x2000, scoped, tag = 'input window, operand 1, single buffered']
    #allocation7 [shape = 's32[1]{0}', space=sflag, size = 0x4, scoped, tag = 'scoped memory for tpu_custom_call.1']
    #allocation8 [shape = 'u8[512]{0}', space=smem, size = 0x200, scoped, tag = 'output window, operand 0, single buffered']
    %7 = vsyncpa [#allocation4], 0
    %8 = vsyncpa [#allocation7], 0
    %9 = vsyncpa [#allocation5], 0
    // Predicated region
    $region2: #{tpu_custom_call.1} parent=1 // pred_check
      _
    $region3: #{tpu_custom_call.1} parent=1 // pred_check_branch
      %11 = sbr.rel (0) target = $region5
    $region4: #{tpu_custom_call.1} parent=1 // pred_region
      %s12 = sadd.s32 0, 0
      %p13 = scmp.lt.s32.totalorder %s12, 0
      %s14 = scalar_select %p13, %s12, 0
      %s15 = smul.u32 2, %s14
      %s17 = ssub.s32 256, 256
      %18 = vsyncadd [#allocation4], %s17
      %s19 = smul.addr %s15, 128
      %s20 = scalar_lea.hbm %s0, %s19
      %s21 = sshll.u32 [#allocation3], 4
      %s22 = int_to_ptr.vmem [resolvable:$true] %s21
      %27 = dma.hbm_to_vmem [thread:$0]  %s20, 256, %s22, [#allocation4], 128, 128, 8
    $region5: #{tpu_custom_call.1} parent=1 // pred_fallthru
      _
    // Predicated region
    $region6: #{tpu_custom_call.1} parent=1 // pred_check
      _
    $region7: #{tpu_custom_call.1} parent=1 // pred_check_branch
      %29 = sbr.rel (0) target = $region9
    $region8: #{tpu_custom_call.1} parent=1 // pred_region
      %s30 = sadd.s32 0, 0
      %p31 = scmp.lt.s32.totalorder %s30, 0
      %s32 = scalar_select %p31, %s30, 0
      %s33 = smul.u32 2, %s32
      %s35 = ssub.s32 256, 256
      %36 = vsyncadd [#allocation7], %s35
      %s37 = smul.addr %s33, 128
      %s38 = scalar_lea.hbm %s1, %s37
      %s39 = sshll.u32 [#allocation6], 4
      %s40 = int_to_ptr.vmem [resolvable:$true] %s39
      %45 = dma.hbm_to_vmem [thread:$0]  %s38, 256, %s40, [#allocation7], 128, 128, 8
    $region9: #{tpu_custom_call.1} parent=1 // pred_fallthru
      _
    // Predicated region
    $region10: #{tpu_custom_call.1} parent=1 // pred_check
      _
    $region11: #{tpu_custom_call.1} parent=1 // pred_check_branch
      %47 = sbr.rel (0) target = $region13
    $region12: #{tpu_custom_call.1} parent=1 // pred_region
      %48 = dma.done [#allocation4], 256
    $region13: #{tpu_custom_call.1} parent=1 // pred_fallthru
      _
    // Predicated region
    $region14: #{tpu_custom_call.1} parent=1 // pred_check
      _
    $region15: #{tpu_custom_call.1} parent=1 // pred_check_branch
      %50 = sbr.rel (0) target = $region17
    $region16: #{tpu_custom_call.1} parent=1 // pred_region
      %51 = dma.done [#allocation7], 256
    $region17: #{tpu_custom_call.1} parent=1 // pred_fallthru
      _
    %s52 = sadd.s32 0, 0
    %p53 = scmp.lt.s32.totalorder %s52, 0
    %s54 = scalar_select %p53, %s52, 0
    %s55 = smul.u32 2, %s54
    %s56 = sadd.s32 0, 0
    %p57 = scmp.lt.s32.totalorder %s56, 0
    %s58 = scalar_select %p57, %s56, 0
    %s59 = smul.u32 2, %s58
    %p60 = scmp.eq.s32.totalorder 0, 0
    // Predicated region
    $region18: #{tpu_custom_call.1} parent=1 // pred_check
      %p61 = pneg %p60
    $region19: #{tpu_custom_call.1} parent=1 // pred_check_branch
      %63 = sbr.rel (%p61) target = $region21
    $region20: #{tpu_custom_call.1} parent=1 // pred_region
      %64 = vst [vmem:[#allocation2] sm:$0xff] 0.0
    $region21: #{tpu_custom_call.1} parent=1 // pred_fallthru
      _
    %s65 = sadd.s32 0, 0
    %s66 = smul.u32 %s65, 16
    %s67 = sadd.s32 %s66, 16
    %p68 = scmp.le.s32.totalorder %s67, 16
    // Predicated region
    $region22: #{tpu_custom_call.1} parent=1 // pred_check
      %p69 = pneg %p68
    $region23: #{tpu_custom_call.1} parent=1 // pred_check_branch
      %71 = sbr.rel (%p69) target = $region25
    $region24: #{tpu_custom_call.1} parent=1 // pred_region
      %v72 = vld [vmem:[#allocation3] sm:$0xff]
      %v73 = vld [vmem:[#allocation3 + $0x8] sm:$0xff]
      %v74 = vld [vmem:[#allocation6] sm:$0xff]
      %v75 = vld [vmem:[#allocation6 + $0x8] sm:$0xff]
      %v76 = vsub.f32 %v72, %v74
      %v77 = vsub.f32 %v73, %v75
      %v78 = vmul.f32 %v76, %v76
      %v79 = vmul.f32 %v77, %v77
      %v80 = vld [vmem:[#allocation2] sm:$0xff]
      %v81 = vadd.f32 %v78, %v79
      %v82 = vadd.f32 %v80, %v81
      %83 = vst [vmem:[#allocation2] sm:$0xff] %v82
    $region25: #{tpu_custom_call.1} parent=1 // pred_fallthru
      _
    %p84 = scmp.gt.s32.totalorder %s67, 16
    // Predicated region
    $region26: #{tpu_custom_call.1} parent=1 // pred_check
      %p85 = pneg %p84
    $region27: #{tpu_custom_call.1} parent=1 // pred_check_branch
      %87 = sbr.rel (%p85) target = $region29
    $region28: #{tpu_custom_call.1} parent=1 // pred_region
      %v88 = vld [vmem:[#allocation3] sm:$0xff]
      %v89 = vld [vmem:[#allocation3 + $0x8] sm:$0xff]
      %v90 = vld [vmem:[#allocation6] sm:$0xff]
      %v91 = vld [vmem:[#allocation6 + $0x8] sm:$0xff]
      %v92 = vsub.f32 %v88, %v90
      %v93 = vsub.f32 %v89, %v91
      %v94 = vlaneseq
      %v95 = vshrl.u32 %v94, 7
      %v96 = vadd.s32 %v95, 8
      %v97 = vstv %s66
      %v98 = vadd.s32 %v97, %v95
      %v99 = vadd.s32 %v97, %v96
      %vm100 = vcmp.lt.s32.totalorder %v98, 16
      %vm101 = vcmp.lt.s32.totalorder %v99, 16
      %v102 = vsel %vm100, %v92, 0.0
      %v103 = vsel %vm101, %v93, 0.0
      %v104 = vmul.f32 %v102, %v102
      %v105 = vmul.f32 %v103, %v103
      %v106 = vld [vmem:[#allocation2] sm:$0xff]
      %v107 = vadd.f32 %v104, %v105
      %v108 = vadd.f32 %v106, %v107
      %109 = vst [vmem:[#allocation2] sm:$0xff] %v108
    $region29: #{tpu_custom_call.1} parent=1 // pred_fallthru
      _
    // Predicated region
    $region30: #{tpu_custom_call.1} parent=1 // pred_check
      %p110 = pneg %p60
    $region31: #{tpu_custom_call.1} parent=1 // pred_check_branch
      %112 = sbr.rel (%p110) target = $region33
    $region32: #{tpu_custom_call.1} parent=1 // pred_region
      %v113 = vld [vmem:[#allocation2] sm:$0xff]
      %114 = vadd.xlane.f32.xlu0 %v113
      %v115 = vpop.xlane.xlu0 %114
      %v116 = vrot.slane %v115, 4
      %v117 = vadd.f32 %v115, %v116
      %v118 = vrot.slane %v117, 2
      %v119 = vadd.f32 %v117, %v118
      %v120 = vrot.slane %v119, 1
      %v121 = vadd.f32 %v119, %v120
      %s122 = vtos %v121
      %s123 = smul.f32 %s122, 0.00048828125
      %s124 = scalar_lea.smem [#allocation8], 0
      %125 = sst [smem:[%s124]] %s123
    $region33: #{tpu_custom_call.1} parent=1 // pred_fallthru
      _
    // Predicated region
    $region34: #{tpu_custom_call.1} parent=1 // pred_check
      _
    $region35: #{tpu_custom_call.1} parent=1 // pred_check_branch
      %127 = sbr.rel (0) target = $region37
    $region36: #{tpu_custom_call.1} parent=1 // pred_region
      %s129 = ssub.s32 16, 16
      %130 = vsyncadd [#allocation5], %s129
      %133 = dma.smem_to_hbm [#allocation8], 16, %s2, [#allocation5]
    $region37: #{tpu_custom_call.1} parent=1 // pred_fallthru
      _
    // Predicated region
    $region38: #{tpu_custom_call.1} parent=1 // pred_check
      _
    $region39: #{tpu_custom_call.1} parent=1 // pred_check_branch
      %135 = sbr.rel (0) target = $region41
    $region40: #{tpu_custom_call.1} parent=1 // pred_region
      %136 = dma.done [#allocation5], 16
    $region41: #{tpu_custom_call.1} parent=1 // pred_fallthru
      _
    %137 = sfence
    %138 = vsyncpa [#allocation4], 1
    %139 = vsyncpa [#allocation7], 1
    %140 = vsyncpa [#allocation5], 1

// kernel: tpu_custom_call.1
$region0: #{tpu_custom_call.1}
  #allocation0 [shape = 'u32[]', space=smem, size = 0x4, offset = 0x4, fixed_abs, tag = 'smem constant byte address 0x4 - core index']
  #allocation1 [shape = 'u32[144,128]{1,0:T(1,128)}', space=vmem, size = 0x12000, scoped, tag = 'internal scratch']
  #allocation2 [shape = 'f32[8,128]{1,0:T(8,128)}', space=vmem, size = 0x1000, scoped, tag = 'scratch operand']
  %s0 = inlined_call_operand.hbm [shape: f32[16,128], index: 0, kind: input, shape index: {}]
  %s1 = inlined_call_operand.hbm [shape: f32[16,128], index: 1, kind: input, shape index: {}]
  %s2 = inlined_call_operand.hbm [shape: f32[1,1], index: 2, kind: output, shape index: {}]
  %s3 = sld [smem:[#allocation0]]
  $region42: #{tpu_custom_call.1} parent=0
    _
  %s5 = ssub.s32 1, %s3
  %s6 = scalar_select 0, %s5, %s3
  $region1: #{tpu_custom_call.1} parent=0
    #allocation3 [shape = 'u8[8192]{0}', space=vmem, size = 0x2000, scoped, tag = 'input window, operand 0, single buffered']
    #allocation4 [shape = 's32[1]{0}', space=sflag, size = 0x4, scoped, tag = 'scoped memory for tpu_custom_call.1']
    #allocation5 [shape = 's32[1]{0}', space=sflag, size = 0x4, scoped, tag = 'scoped memory for tpu_custom_call.1']
    #allocation6 [shape = 'u8[8192]{0}', space=vmem, size = 0x2000, scoped, tag = 'input window, operand 1, single buffered']
    #allocation7 [shape = 's32[1]{0}', space=sflag, size = 0x4, scoped, tag = 'scoped memory for tpu_custom_call.1']
    #allocation8 [shape = 'u8[512]{0}', space=smem, size = 0x200, scoped, tag = 'output window, operand 0, single buffered']
    %7 = vsyncpa [#allocation4], 0
    %8 = vsyncpa [#allocation7], 0
    %9 = vsyncpa [#allocation5], 0
    // Predicated region
    $region2: #{tpu_custom_call.1} parent=1 // pred_check
      _
    $region3: #{tpu_custom_call.1} parent=1 // pred_check_branch
      %11 = sbr.rel (0) target = $region5
    $region4: #{tpu_custom_call.1} parent=1 // pred_region
      %s12 = sadd.s32 0, 0
      %p13 = scmp.lt.s32.totalorder %s12, 0
      %s14 = scalar_select %p13, %s12, 0
      %s15 = smul.u32 2, %s14
      %s17 = ssub.s32 256, 256
      %18 = vsyncadd [#allocation4], %s17
      %s19 = smul.addr %s15, 128
      %s20 = scalar_lea.hbm %s0, %s19
      %s21 = sshll.u32 [#allocation3], 4
      %s22 = int_to_ptr.vmem [resolvable:$true] %s21
      %27 = dma.hbm_to_vmem [thread:$0]  %s20, 256, %s22, [#allocation4], 128, 128, 8
    $region5: #{tpu_custom_call.1} parent=1 // pred_fallthru
      _
    // Predicated region
    $region6: #{tpu_custom_call.1} parent=1 // pred_check
      _
    $region7: #{tpu_custom_call.1} parent=1 // pred_check_branch
      %29 = sbr.rel (0) target = $region9
    $region8: #{tpu_custom_call.1} parent=1 // pred_region
      %s30 = sadd.s32 0, 0
      %p31 = scmp.lt.s32.totalorder %s30, 0
      %s32 = scalar_select %p31, %s30, 0
      %s33 = smul.u32 2, %s32
      %s35 = ssub.s32 256, 256
      %36 = vsyncadd [#allocation7], %s35
      %s37 = smul.addr %s33, 128
      %s38 = scalar_lea.hbm %s1, %s37
      %s39 = sshll.u32 [#allocation6], 4
      %s40 = int_to_ptr.vmem [resolvable:$true] %s39
      %45 = dma.hbm_to_vmem [thread:$0]  %s38, 256, %s40, [#allocation7], 128, 128, 8
    $region9: #{tpu_custom_call.1} parent=1 // pred_fallthru
      _
    // Predicated region
    $region10: #{tpu_custom_call.1} parent=1 // pred_check
      _
    $region11: #{tpu_custom_call.1} parent=1 // pred_check_branch
      %47 = sbr.rel (0) target = $region13
    $region12: #{tpu_custom_call.1} parent=1 // pred_region
      %48 = dma.done [#allocation4], 256
    $region13: #{tpu_custom_call.1} parent=1 // pred_fallthru
      _
    // Predicated region
    $region14: #{tpu_custom_call.1} parent=1 // pred_check
      _
    $region15: #{tpu_custom_call.1} parent=1 // pred_check_branch
      %50 = sbr.rel (0) target = $region17
    $region16: #{tpu_custom_call.1} parent=1 // pred_region
      %51 = dma.done [#allocation7], 256
    $region17: #{tpu_custom_call.1} parent=1 // pred_fallthru
      _
    %s52 = sadd.s32 0, 0
    %p53 = scmp.lt.s32.totalorder %s52, 0
    %s54 = scalar_select %p53, %s52, 0
    %s55 = smul.u32 2, %s54
    %s56 = sadd.s32 0, 0
    %p57 = scmp.lt.s32.totalorder %s56, 0
    %s58 = scalar_select %p57, %s56, 0
    %s59 = smul.u32 2, %s58
    %p60 = scmp.eq.s32.totalorder 0, 0
    // Predicated region
    $region18: #{tpu_custom_call.1} parent=1 // pred_check
      %p61 = pneg %p60
    $region19: #{tpu_custom_call.1} parent=1 // pred_check_branch
      %63 = sbr.rel (%p61) target = $region21
    $region20: #{tpu_custom_call.1} parent=1 // pred_region
      %64 = vst [vmem:[#allocation2] sm:$0xff] 0.0
    $region21: #{tpu_custom_call.1} parent=1 // pred_fallthru
      _
    %s65 = sadd.s32 0, 0
    %s66 = smul.u32 %s65, 16
    %s67 = sadd.s32 %s66, 16
    %p68 = scmp.le.s32.totalorder %s67, 16
    // Predicated region
    $region22: #{tpu_custom_call.1} parent=1 // pred_check
      %p69 = pneg %p68
    $region23: #{tpu_custom_call.1} parent=1 // pred_check_branch
      %71 = sbr.rel (%p69) target = $region25
    $region24: #{tpu_custom_call.1} parent=1 // pred_region
      %v72 = vld [vmem:[#allocation3] sm:$0xff]
      %v73 = vld [vmem:[#allocation3 + $0x8] sm:$0xff]
      %v74 = vld [vmem:[#allocation6] sm:$0xff]
      %v75 = vld [vmem:[#allocation6 + $0x8] sm:$0xff]
      %v76 = vsub.f32 %v72, %v74
      %v77 = vsub.f32 %v73, %v75
      %v78 = vmul.f32 %v76, %v76
      %v79 = vmul.f32 %v77, %v77
      %v80 = vld [vmem:[#allocation2] sm:$0xff]
      %v81 = vadd.f32 %v78, %v79
      %v82 = vadd.f32 %v80, %v81
      %83 = vst [vmem:[#allocation2] sm:$0xff] %v82
    $region25: #{tpu_custom_call.1} parent=1 // pred_fallthru
      _
    %p84 = scmp.gt.s32.totalorder %s67, 16
    // Predicated region
    $region26: #{tpu_custom_call.1} parent=1 // pred_check
      %p85 = pneg %p84
    $region27: #{tpu_custom_call.1} parent=1 // pred_check_branch
      %87 = sbr.rel (%p85) target = $region29
    $region28: #{tpu_custom_call.1} parent=1 // pred_region
      %v88 = vld [vmem:[#allocation3] sm:$0xff]
      %v89 = vld [vmem:[#allocation3 + $0x8] sm:$0xff]
      %v90 = vld [vmem:[#allocation6] sm:$0xff]
      %v91 = vld [vmem:[#allocation6 + $0x8] sm:$0xff]
      %v92 = vsub.f32 %v88, %v90
      %v93 = vsub.f32 %v89, %v91
      %v94 = vlaneseq
      %v95 = vshrl.u32 %v94, 7
      %v96 = vadd.s32 %v95, 8
      %v97 = vstv %s66
      %v98 = vadd.s32 %v97, %v95
      %v99 = vadd.s32 %v97, %v96
      %vm100 = vcmp.lt.s32.totalorder %v98, 16
      %vm101 = vcmp.lt.s32.totalorder %v99, 16
      %v102 = vsel %vm100, %v92, 0.0
      %v103 = vsel %vm101, %v93, 0.0
      %v104 = vmul.f32 %v102, %v102
      %v105 = vmul.f32 %v103, %v103
      %v106 = vld [vmem:[#allocation2] sm:$0xff]
      %v107 = vadd.f32 %v104, %v105
      %v108 = vadd.f32 %v106, %v107
      %109 = vst [vmem:[#allocation2] sm:$0xff] %v108
    $region29: #{tpu_custom_call.1} parent=1 // pred_fallthru
      _
    // Predicated region
    $region30: #{tpu_custom_call.1} parent=1 // pred_check
      %p110 = pneg %p60
    $region31: #{tpu_custom_call.1} parent=1 // pred_check_branch
      %112 = sbr.rel (%p110) target = $region33
    $region32: #{tpu_custom_call.1} parent=1 // pred_region
      %v113 = vld [vmem:[#allocation2] sm:$0xff]
      %114 = vadd.xlane.f32.xlu0 %v113
      %v115 = vpop.xlane.xlu0 %114
      %v116 = vrot.slane %v115, 4
      %v117 = vadd.f32 %v115, %v116
      %v118 = vrot.slane %v117, 2
      %v119 = vadd.f32 %v117, %v118
      %v120 = vrot.slane %v119, 1
      %v121 = vadd.f32 %v119, %v120
      %s122 = vtos %v121
      %s123 = smul.f32 %s122, 0.00048828125
      %s124 = scalar_lea.smem [#allocation8], 0
      %125 = sst [smem:[%s124]] %s123
    $region33: #{tpu_custom_call.1} parent=1 // pred_fallthru
      _
    // Predicated region
    $region34: #{tpu_custom_call.1} parent=1 // pred_check
      _
    $region35: #{tpu_custom_call.1} parent=1 // pred_check_branch
      %127 = sbr.rel (0) target = $region37
    $region36: #{tpu_custom_call.1} parent=1 // pred_region
      %s129 = ssub.s32 16, 16
      %130 = vsyncadd [#allocation5], %s129
      %133 = dma.smem_to_hbm [#allocation8], 16, %s2, [#allocation5]
    $region37: #{tpu_custom_call.1} parent=1 // pred_fallthru
      _
    // Predicated region
    $region38: #{tpu_custom_call.1} parent=1 // pred_check
      _
    $region39: #{tpu_custom_call.1} parent=1 // pred_check_branch
      %135 = sbr.rel (0) target = $region41
    $region40: #{tpu_custom_call.1} parent=1 // pred_region
      %136 = dma.done [#allocation5], 16
    $region41: #{tpu_custom_call.1} parent=1 // pred_fallthru
      _
    %137 = sfence
    %138 = vsyncpa [#allocation4], 1
    %139 = vsyncpa [#allocation7], 1
    %140 = vsyncpa [#allocation5], 1

</llo_original>
